<compile_context>
chip_gen: v6e
topology: v6e:2x2x1
jax: 0.10.0
libtpu: 0.0.40
codegen_flags: <defaults>
</compile_context>

<pallas_src>
import math

import jax
import jax.numpy as jnp
from jax.experimental import pallas as pl
from jax.experimental.pallas import tpu as pltpu


def _round_up(x, m):
    return (x + m - 1) // m * m


def _decode_gemm_kernel(x_ref, w_ref, add_ref, out_ref):
    # x_ref:   (tm, D)   rows of the flattened (B*T, D) hidden states
    # w_ref:   (D, tn)   decode weight (transposed, zero-padded on N)
    # add_ref: (tm, tn)  folded additive term (PE@Wd + style@Wd + b_dec + template)
    # out_ref: (tm, tn)  predicted vertices (padded slab)
    acc = jnp.dot(x_ref[...], w_ref[...], preferred_element_type=jnp.float32)
    out_ref[...] = (acc + add_ref[...]).astype(out_ref.dtype)


def _sinusoidal_pe(T, D):
    """Standard sinusoidal positional-encoding table, PE(x) = x + pe[:T]."""
    position = jnp.arange(T, dtype=jnp.float32)[:, None]                  # (T, 1)
    div_term = jnp.exp(jnp.arange(0, D, 2, dtype=jnp.float32)
                       * (-math.log(10000.0) / D))                        # (ceil(D/2),)
    ang = position * div_term                                             # (T, ceil(D/2))
    pe = jnp.zeros((T, D), dtype=jnp.float32)
    pe = pe.at[:, 0::2].set(jnp.sin(ang))
    pe = pe.at[:, 1::2].set(jnp.cos(ang)[:, : D // 2])                    # odd-D safe
    return pe


def feed_forward_decoder(seq_encoder_output, one_hot, template,
                         w_style, w_dec, b_dec, *,
                         compute_dtype=jnp.float32,
                         tm_max=256, tn_max=512):
    """FeedForwardDecoder.forward (onehot_linear + add + sinusoidal PE + linear decode).

    seq_encoder_output: (B, T, D) f32
    one_hot:            (B, S)    f32
    template:           (B, V3)   f32
    w_style:            (D, S)    f32  (PyTorch nn.Linear(S, D, bias=False) weight)
    w_dec:              (V3, D)   f32  (PyTorch nn.Linear(D, V3) weight)
    b_dec:              (V3,)     f32
    compute_dtype:      matmul operand dtype (jnp.float32 or jnp.bfloat16);
                        accumulation + epilogue adds are always f32.
    returns predicted_vertices: (B, T, V3) f32
    """
    B, T, D = seq_encoder_output.shape
    V3 = template.shape[-1]
    M = B * T

    # ---------- algebraic folding (plain JAX glue; tiny ops, overlap with kernel) ----------
    pe = _sinusoidal_pe(T, D)                                             # (T, D)
    w_dec_t = w_dec.T.astype(jnp.float32)                                 # (D, V3)
    pe_dec = pe @ w_dec_t                                                 # (T, V3)
    style = one_hot.astype(jnp.float32) @ w_style.T.astype(jnp.float32)   # (B, D)
    style_dec = style @ w_dec_t                                           # (B, V3)
    b_eff = style_dec + b_dec[None, :] + template.astype(jnp.float32)     # (B, V3)
    add_full = (pe_dec[None, :, :] + b_eff[:, None, :]).reshape(M, V3)    # (B*T, V3)

    # ---------- lane-dense padding / tiling ----------
    tn = min(tn_max, _round_up(V3, 128))       # N tile, multiple of 128 (lane-dense)
    V3p = _round_up(V3, tn)
    tm = min(tm_max, _round_up(M, 8))          # M tile, multiple of 8 sublanes
    Mp = _round_up(M, tm)

    x2 = seq_encoder_output.reshape(M, D).astype(jnp.float32)
    if Mp > M:
        x2 = jnp.pad(x2, ((0, Mp - M), (0, 0)))
        add_full = jnp.pad(add_full, ((0, Mp - M), (0, 0)))
    if V3p > V3:
        w_dec_t = jnp.pad(w_dec_t, ((0, 0), (0, V3p - V3)))
        add_full = jnp.pad(add_full, ((0, 0), (0, V3p - V3)))

    x_mat = x2.astype(compute_dtype)
    w_mat = w_dec_t.astype(compute_dtype)
    add_mat = add_full.astype(jnp.float32)

    # N outer, M inner: the (D, tn) weight tile has a constant block index over
    # the inner axis, so it is fetched once per N tile and stays VMEM-resident.
    grid = (V3p // tn, Mp // tm)

    itemsize = jnp.dtype(compute_dtype).itemsize
    cost = pl.CostEstimate(
        flops=2 * Mp * D * V3p,
        transcendentals=0,
        bytes_accessed=(Mp * D + D * V3p) * itemsize + 2 * Mp * V3p * 4,
    )
    # 2x double-buffering per streamed operand (x, w, add, out), plus headroom.
    vmem_need = 2 * ((tm * D + D * tn) * itemsize + 2 * tm * tn * 4) + (1 << 20)
    vmem_limit = int(min(max(vmem_need, 32 * 1024 * 1024), 64 * 1024 * 1024))

    out_padded = pl.pallas_call(
        _decode_gemm_kernel,
        out_shape=jax.ShapeDtypeStruct((Mp, V3p), jnp.float32),
        grid_spec=pltpu.PrefetchScalarGridSpec(
            num_scalar_prefetch=0,
            grid=grid,
            in_specs=[
                pl.BlockSpec((tm, D), lambda j, i: (i, 0)),    # x rows
                pl.BlockSpec((D, tn), lambda j, i: (0, j)),    # decode weight tile
                pl.BlockSpec((tm, tn), lambda j, i: (i, j)),   # folded additive term
            ],
            out_specs=pl.BlockSpec((tm, tn), lambda j, i: (i, j)),
        ),
        compiler_params=pltpu.CompilerParams(
            dimension_semantics=("parallel", "parallel"),
            vmem_limit_bytes=vmem_limit,
        ),
        cost_estimate=cost,
    )(x_mat, w_mat, add_mat)

    return out_padded[:M, :V3].reshape(B, T, V3)


def _reference(seq_encoder_output, one_hot, template, w_style, w_dec, b_dec):
    """Plain-JAX reference of the same forward pass (un-folded order)."""
    B, T, D = seq_encoder_output.shape
    pe = _sinusoidal_pe(T, D)
    h = seq_encoder_output + pe[None]                       # positional encoding
    style = one_hot @ w_style.T                             # (B, D)
    styled = h + style[:, None, :]                          # style_op == 'add'
    offsets = styled @ w_dec.T + b_dec                      # linear _decode (vertex_map)
    return offsets + template[:, None, :]                   # _post_prediction


if __name__ == "__main__":
    # Small deterministic shapes consistent with the module's forward pass.
    B, T, D = 2, 8, 32      # batch, sequence length, feature_dim
    S = 4                   # num_training_subjects (one-hot size)
    V = 5                   # number of vertices
    V3 = V * 3

    key = jax.random.PRNGKey(0)
    k_x, k_w1, k_w2, k_b, k_t = jax.random.split(key, 5)

    seq_encoder_output = jax.random.normal(k_x, (B, T, D), dtype=jnp.float32)
    one_hot = jnp.eye(S, dtype=jnp.float32)[jnp.array([0, 2]) % S]          # (B, S)
    template = 0.1 * jax.random.normal(k_t, (B, V3), dtype=jnp.float32)

    # Deterministic synthetic parameters (PyTorch nn.Linear weight layouts).
    w_style = 0.05 * jax.random.normal(k_w1, (D, S), dtype=jnp.float32)     # Linear(S, D, bias=False)
    w_dec = 0.05 * jax.random.normal(k_w2, (V3, D), dtype=jnp.float32)      # Linear(D, V3)
    b_dec = 0.01 * jax.random.normal(k_b, (V3,), dtype=jnp.float32)

    ref = _reference(seq_encoder_output, one_hot, template, w_style, w_dec, b_dec)

    # f32 path (tight tolerance).
    out_f32 = feed_forward_decoder(seq_encoder_output, one_hot, template,
                                   w_style, w_dec, b_dec,
                                   compute_dtype=jnp.float32)
    out_f32 = jax.block_until_ready(out_f32)
    assert out_f32.shape == (B, T, V3)
    assert jnp.allclose(out_f32, ref, atol=1e-5, rtol=1e-5), "f32 mismatch vs reference"

    # bf16-operand / f32-accumulate path (v6e/v7x MXU dtype suggestion).
    out_bf16 = feed_forward_decoder(seq_encoder_output, one_hot, template,
                                    w_style, w_dec, b_dec,
                                    compute_dtype=jnp.bfloat16)
    out_bf16 = jax.block_until_ready(out_bf16)
    assert out_bf16.shape == (B, T, V3)
    assert jnp.allclose(out_bf16, ref, atol=5e-2, rtol=5e-2), "bf16 mismatch vs reference"

    print("KERNEL_OK")
</pallas_src>

<mosaic_0001>
module attributes {stable_mosaic.version = 11 : i64} {
  func.func @_decode_gemm_kernel(%arg0: i32, %arg1: i32, %arg2: memref<16x32xf32, #tpu.memory_space<vmem>>, %arg3: memref<32x128xf32, #tpu.memory_space<vmem>>, %arg4: memref<16x128xf32, #tpu.memory_space<vmem>>, %arg5: memref<16x128xf32, #tpu.memory_space<vmem>>) attributes {dimension_semantics = [#tpu.dimension_semantics<parallel>, #tpu.dimension_semantics<parallel>], iteration_bounds = array<i64: 1, 1>, scalar_prefetch = 0 : i64, scratch_operands = 0 : i64, tpu.core_type = #tpu.core_type<tc>, window_params = [{transform_indices = @transform_0, window_bounds = array<i64: 16, 32>}, {transform_indices = @transform_1, window_bounds = array<i64: 32, 128>}, {transform_indices = @transform_2, window_bounds = array<i64: 16, 128>}, {transform_indices = @transform_3, window_bounds = array<i64: 16, 128>}]} {
    %c0 = arith.constant 0 : index
    %c0_0 = arith.constant 0 : index
    %0 = vector.load %arg2[%c0, %c0_0] : memref<16x32xf32, #tpu.memory_space<vmem>>, vector<16x32xf32>
    %c0_1 = arith.constant 0 : index
    %c0_2 = arith.constant 0 : index
    %1 = vector.load %arg3[%c0_1, %c0_2] : memref<32x128xf32, #tpu.memory_space<vmem>>, vector<32x128xf32>
    %cst = arith.constant dense<0.000000e+00> : vector<16x128xf32>
    %2 = tpu.matmul %0, %1, %cst {dimension_numbers = #tpu.dot_dimension_numbers<[1], [0], [0], [1], [0, 0, 1, 1], [], []>} : vector<16x32xf32>, vector<32x128xf32>, vector<16x128xf32> -> vector<16x128xf32>
    %c0_3 = arith.constant 0 : index
    %c0_4 = arith.constant 0 : index
    %3 = vector.load %arg4[%c0_3, %c0_4] : memref<16x128xf32, #tpu.memory_space<vmem>>, vector<16x128xf32>
    %4 = arith.addf %2, %3 : vector<16x128xf32>
    %c0_5 = arith.constant 0 : index
    %c0_6 = arith.constant 0 : index
    %5 = vector.load %arg5[%c0_5, %c0_6] : memref<16x128xf32, #tpu.memory_space<vmem>>, vector<16x128xf32>
    tpu.vector_store %arg5[%c0_5, %c0_6], %4 {strides = array<i32>} : memref<16x128xf32, #tpu.memory_space<vmem>>, vector<16x128xf32>,
    return
  }
  func.func @transform_0(%arg0: i32, %arg1: i32) -> (i32, i32) {
    %c0_i32 = arith.constant 0 : i32
    %c0_i32_0 = arith.constant 0 : i32
    return %arg1, %c0_i32 : i32, i32
  }
  func.func @transform_1(%arg0: i32, %arg1: i32) -> (i32, i32) {
    %c0_i32 = arith.constant 0 : i32
    %c0_i32_0 = arith.constant 0 : i32
    return %c0_i32, %arg0 : i32, i32
  }
  func.func @transform_2(%arg0: i32, %arg1: i32) -> (i32, i32) {
    %c0_i32 = arith.constant 0 : i32
    return %arg1, %arg0 : i32, i32
  }
  func.func @transform_3(%arg0: i32, %arg1: i32) -> (i32, i32) {
    %c0_i32 = arith.constant 0 : i32
    return %arg1, %arg0 : i32, i32
  }
}

</mosaic_0001>

<llo_original>
// kernel: tpu_custom_call.1
$region0: #{tpu_custom_call.1}
  #allocation0 [shape = 'u32[]', space=smem, size = 0x4, offset = 0x4, fixed_abs, tag = 'smem constant byte address 0x4 - core index']
  #allocation1 [shape = 'u32[144,128]{1,0:T(1,128)}', space=vmem, size = 0x12000, scoped, tag = 'internal scratch']
  %s0 = inlined_call_operand.hbm [shape: f32[16,32], index: 0, kind: input, shape index: {}]
  %s1 = inlined_call_operand.hbm [shape: f32[32,128], index: 1, kind: input, shape index: {}]
  %s2 = inlined_call_operand.hbm [shape: f32[16,128], index: 2, kind: input, shape index: {}]
  %s3 = inlined_call_operand.hbm [shape: f32[16,128], index: 3, kind: output, shape index: {}]
  %s4 = sld [smem:[#allocation0]]
  $region34: #{tpu_custom_call.1} parent=0
    _
  %s6 = ssub.s32 1, %s4
  %s7 = scalar_select 0, %s6, %s4
  $region1: #{tpu_custom_call.1} parent=0
    #allocation2 [shape = 'u8[8192]{0}', space=vmem, size = 0x2000, scoped, tag = 'input window, operand 0, single buffered']
    #allocation3 [shape = 's32[1]{0}', space=sflag, size = 0x4, scoped, tag = 'scoped memory for tpu_custom_call.1']
    #allocation4 [shape = 's32[1]{0}', space=sflag, size = 0x4, scoped, tag = 'scoped memory for tpu_custom_call.1']
    #allocation5 [shape = 'u8[16384]{0}', space=vmem, size = 0x4000, scoped, tag = 'input window, operand 1, single buffered']
    #allocation6 [shape = 's32[1]{0}', space=sflag, size = 0x4, scoped, tag = 'scoped memory for tpu_custom_call.1']
    #allocation7 [shape = 'u8[8192]{0}', space=vmem, size = 0x2000, scoped, tag = 'input window, operand 2, single buffered']
    #allocation8 [shape = 'u8[8192]{0}', space=vmem, size = 0x2000, scoped, tag = 'output window, operand 0, single buffered']
    %8 = vsyncpa [#allocation3], 0
    %9 = vsyncpa [#allocation6], 0
    %10 = vsyncpa [#allocation4], 0
    // Predicated region
    $region2: #{tpu_custom_call.1} parent=1 // pred_check
      _
    $region3: #{tpu_custom_call.1} parent=1 // pred_check_branch
      %12 = sbr.rel (0) target = $region5
    $region4: #{tpu_custom_call.1} parent=1 // pred_region
      %s14 = ssub.s32 256, 256
      %15 = vsyncadd [#allocation3], %s14
      %s16 = sshll.u32 [#allocation2], 4
      %s17 = int_to_ptr.vmem [resolvable:$true] %s16
      %22 = dma.hbm_to_vmem [thread:$0]  %s0, 256, %s17, [#allocation3], 128, 128, 8
    $region5: #{tpu_custom_call.1} parent=1 // pred_fallthru
      _
    // Predicated region
    $region6: #{tpu_custom_call.1} parent=1 // pred_check
      _
    $region7: #{tpu_custom_call.1} parent=1 // pred_check_branch
      %24 = sbr.rel (0) target = $region9
    $region8: #{tpu_custom_call.1} parent=1 // pred_region
      %s26 = ssub.s32 512, 512
      %27 = vsyncadd [#allocation6], %s26
      %s28 = sshll.u32 [#allocation5], 4
      %s29 = int_to_ptr.vmem [resolvable:$true] %s28
      %34 = dma.hbm_to_vmem [thread:$0]  %s1, 512, %s29, [#allocation6], 128, 128, 8
    $region9: #{tpu_custom_call.1} parent=1 // pred_fallthru
      _
    // Predicated region
    $region10: #{tpu_custom_call.1} parent=1 // pred_check
      _
    $region11: #{tpu_custom_call.1} parent=1 // pred_check_branch
      %36 = sbr.rel (0) target = $region13
    $region12: #{tpu_custom_call.1} parent=1 // pred_region
      %s38 = ssub.s32 256, 256
      %39 = vsyncadd [#allocation6], %s38
      %s40 = sshll.u32 [#allocation7], 4
      %s41 = int_to_ptr.vmem [resolvable:$true] %s40
      %46 = dma.hbm_to_vmem [thread:$0]  %s2, 256, %s41, [#allocation6], 128, 128, 8
    $region13: #{tpu_custom_call.1} parent=1 // pred_fallthru
      _
    // Predicated region
    $region14: #{tpu_custom_call.1} parent=1 // pred_check
      _
    $region15: #{tpu_custom_call.1} parent=1 // pred_check_branch
      %48 = sbr.rel (0) target = $region17
    $region16: #{tpu_custom_call.1} parent=1 // pred_region
      %49 = dma.done [#allocation3], 256
    $region17: #{tpu_custom_call.1} parent=1 // pred_fallthru
      _
    // Predicated region
    $region18: #{tpu_custom_call.1} parent=1 // pred_check
      _
    $region19: #{tpu_custom_call.1} parent=1 // pred_check_branch
      %51 = sbr.rel (0) target = $region21
    $region20: #{tpu_custom_call.1} parent=1 // pred_region
      %52 = dma.done [#allocation6], 512
    $region21: #{tpu_custom_call.1} parent=1 // pred_fallthru
      _
    // Predicated region
    $region22: #{tpu_custom_call.1} parent=1 // pred_check
      _
    $region23: #{tpu_custom_call.1} parent=1 // pred_check_branch
      %54 = sbr.rel (0) target = $region25
    $region24: #{tpu_custom_call.1} parent=1 // pred_region
      %55 = dma.done [#allocation6], 256
    $region25: #{tpu_custom_call.1} parent=1 // pred_fallthru
      _
    %v56 = vld [vmem:[#allocation2] sm:$0xff]
    %v57 = vld [vmem:[#allocation2 + $0x8] sm:$0xff]
    %v58 = vld [vmem:[#allocation5] sm:$0xff]
    %v59 = vld [vmem:[#allocation5 + $0x8] sm:$0xff]
    %v60 = vld [vmem:[#allocation5 + $0x10] sm:$0xff]
    %v61 = vld [vmem:[#allocation5 + $0x18] sm:$0xff]
    %v62 = vld [vmem:[#allocation7] sm:$0xff]
    %v63 = vld [vmem:[#allocation7 + $0x8] sm:$0xff]
    %vm64 = vcmask 261120
    %v66 = vsel %vm64, %v56, 0
    %v69 = vsel %vm64, %v57, 0
    %71 = vmatprep.subr.mxu0 0.0
    %72 = vmatpush1.msra.mxu0 0.0
    %73 = vmatprep.subr.mxu0 0.0
    %74 = vmatpush1.msra.mxu0 0.0
    %75 = vmatprep.subr.mxu0 0.0
    %76 = vmatpush1.msra.mxu0 0.0
    %77 = vmatprep.subr.mxu0 0.0
    %78 = vmatpush1.msra.mxu0 0.0
    %79 = vmatprep.subr.mxu0 0.0
    %80 = vmatpush1.msra.mxu0 0.0
    %81 = vmatprep.subr.mxu0 0.0
    %82 = vmatpush1.msra.mxu0 0.0
    %83 = vmatprep.subr.mxu0 0.0
    %84 = vmatpush1.msra.mxu0 0.0
    %85 = vmatprep.subr.mxu0 0.0
    %86 = vmatpush1.msra.mxu0 0.0
    %87 = vmatprep.subr.mxu0 0.0
    %88 = vmatpush1.msra.mxu0 0.0
    %89 = vmatprep.subr.mxu0 0.0
    %90 = vmatpush1.msra.mxu0 0.0
    %91 = vmatprep.subr.mxu0 0.0
    %92 = vmatpush1.msra.mxu0 0.0
    %93 = vmatprep.subr.mxu0 0.0
    %94 = vmatpush1.msra.mxu0 0.0
    %95 = vmatprep.subr.mxu0 0.0
    %96 = vmatpush1.msra.mxu0 %v61
    %97 = vmatprep.subr.mxu0 0.0
    %98 = vmatpush1.msra.mxu0 %v60
    %99 = vmatprep.subr.mxu0 0.0
    %100 = vmatpush1.msra.mxu0 %v59
    %101 = vmatprep.subr.mxu0 0.0
    %102 = vmatpush1.msra.mxu0 %v58
    %103 = vmatprep.subr.mxu0 0.0
    %104 = vmatpush2.msra.mxu0 0.0
    %105 = vmatprep.subr.mxu0 0.0
    %106 = vmatpush2.msra.mxu0 0.0
    %107 = vmatprep.subr.mxu0 0.0
    %108 = vmatpush2.msra.mxu0 0.0
    %109 = vmatprep.subr.mxu0 0.0
    %110 = vmatpush2.msra.mxu0 0.0
    %111 = vmatprep.subr.mxu0 0.0
    %112 = vmatpush2.msra.mxu0 0.0
    %113 = vmatprep.subr.mxu0 0.0
    %114 = vmatpush2.msra.mxu0 0.0
    %115 = vmatprep.subr.mxu0 0.0
    %116 = vmatpush2.msra.mxu0 0.0
    %117 = vmatprep.subr.mxu0 0.0
    %118 = vmatpush2.msra.mxu0 0.0
    %119 = vmatprep.subr.mxu0 0.0
    %120 = vmatpush2.msra.mxu0 0.0
    %121 = vmatprep.subr.mxu0 0.0
    %122 = vmatpush2.msra.mxu0 0.0
    %123 = vmatprep.subr.mxu0 0.0
    %124 = vmatpush2.msra.mxu0 0.0
    %125 = vmatprep.subr.mxu0 0.0
    %126 = vmatpush2.msra.mxu0 0.0
    %127 = vmatprep.subr.mxu0 0.0
    %128 = vmatpush2.msra.mxu0 0.0
    %129 = vmatprep.subr.mxu0 0.0
    %130 = vmatpush2.msra.mxu0 0.0
    %131 = vmatprep.subr.mxu0 0.0
    %132 = vmatpush2.msra.mxu0 0.0
    %133 = vmatprep.subr.mxu0 0.0
    %134 = vmatpush2.msra.mxu0 0.0
    %135 = vmatprep.mubr.f32.mxu0 0.0
    %136 = vmatmul.mubr.f32.gmra.mxu0 %v66
    %v137 = vpop.f32.mrf.mxu0
    %v138 = vadd.f32 %v62, %v137
    %v139 = vpop.f32.mrf.mxu0
    %140 = vmatprep.mubr.f32.mxu0 0.0
    %141 = vmatmul.mubr.f32.gmra.mxu0 %v69
    %v142 = vpop.f32.mrf.mxu0
    %v143 = vadd.f32 %v63, %v142
    %v144 = vpop.f32.mrf.mxu0
    %145 = vdwg.mxu0
    %146 = vst [vmem:[#allocation8] sm:$0xff] %v138
    %147 = vst [vmem:[#allocation8 + $0x8] sm:$0xff] %v143
    // Predicated region
    $region26: #{tpu_custom_call.1} parent=1 // pred_check
      _
    $region27: #{tpu_custom_call.1} parent=1 // pred_check_branch
      %149 = sbr.rel (0) target = $region29
    $region28: #{tpu_custom_call.1} parent=1 // pred_region
      %s151 = ssub.s32 256, 256
      %152 = vsyncadd [#allocation4], %s151
      %s153 = sshll.u32 [#allocation8], 4
      %s154 = int_to_ptr.vmem [resolvable:$true] %s153
      %159 = dma.vmem_to_hbm [thread:$0]  %s154, 256, %s3, [#allocation4], 128, 128, 8
    $region29: #{tpu_custom_call.1} parent=1 // pred_fallthru
      _
    // Predicated region
    $region30: #{tpu_custom_call.1} parent=1 // pred_check
      _
    $region31: #{tpu_custom_call.1} parent=1 // pred_check_branch
      %161 = sbr.rel (0) target = $region33
    $region32: #{tpu_custom_call.1} parent=1 // pred_region
      %162 = dma.done [#allocation4], 256
    $region33: #{tpu_custom_call.1} parent=1 // pred_fallthru
      _
    %163 = vsyncpa [#allocation3], 1
    %164 = vsyncpa [#allocation6], 1
    %165 = vsyncpa [#allocation4], 1

</llo_original>
